<compile_context>
chip_gen: v6e
topology: v6e:2x2x1
jax: 0.10.0
libtpu: 0.0.40
codegen_flags: <defaults>
</compile_context>

<pallas_src>
import functools

import jax
import jax.numpy as jnp
from jax import lax
from jax.experimental import pallas as pl
from jax.experimental.pallas import tpu as pltpu


_VMEM_TILE_BUDGET = 24 * 1024 * 1024   # conservative: fits v7x (64 MiB phys, 32 MiB scoped)
_VMEM_LIMIT_BYTES = 40 * 1024 * 1024


def _patch_embed_kernel(x_ref, w_ref, b_ref, o_ref):
    # x_ref: (tm, K)  patch tile (f32 or bf16)
    # w_ref: (K, tn)  flattened conv weight tile (same dtype as x tile)
    # b_ref: (1, tn)  bias, always f32 (epilogue in f32 — v5e VPU has no bf16)
    # o_ref: (tm, tn) output tile
    acc = jnp.dot(x_ref[...], w_ref[...], preferred_element_type=jnp.float32)
    o_ref[...] = (acc + b_ref[...]).astype(o_ref.dtype)


def prepare_patch_embed_params(weight, bias, compute_dtype=None):
    """Per-init (not per-call) parameter transform.

    weight: (E, C, P, P) -> (K, E) with K flattened in (c, p, q) order, matching the
    patch flattening in patch_embed_forward.  bias stays f32.
    compute_dtype=jnp.bfloat16 enables bf16 streaming of the big operands (v6e/v7x).
    """
    E = weight.shape[0]
    K = weight.shape[1] * weight.shape[2] * weight.shape[3]
    w2d = weight.reshape(E, K).T
    if compute_dtype is not None:
        w2d = w2d.astype(compute_dtype)
    b2d = bias.reshape(1, E).astype(jnp.float32)
    return w2d, b2d


def _choose_tile_n(E, K, in_bytes, budget):
    """Keep full E (lane-dense) unless the resident weight block would eat VMEM."""
    if E % 128 != 0:
        return E                                  # full-extent blocks are always legal
    tn = E
    while 2 * K * tn * in_bytes > budget // 2 and tn > 128:
        cands = [t for t in range(tn - 128, 127, -128) if E % t == 0]
        if not cands:
            break
        tn = cands[0]
    return tn


def _choose_tile_m(M, K, tn, in_bytes, out_bytes, budget):
    fixed = 2 * K * tn * in_bytes + 2 * tn * 4          # dbl-buffered weight + f32 bias
    per_row = 2 * K * in_bytes + 2 * tn * out_bytes     # dbl-buffered x tile + out tile
    tm = max(8, (budget - fixed) // per_row)
    tm = min(512, int(tm))
    tm = (tm // 8) * 8
    if M <= tm:
        # Small problems: keep >= 2 grid steps so both v7x TensorCores get work.
        half = -(-M // 2)            # ceil(M / 2)
        tm = -(-half // 8) * 8       # round up to a sublane multiple
    return max(8, int(tm))


@functools.partial(jax.jit, static_argnames=("patch_size",))
def patch_embed_forward(x, w2d, b2d, patch_size):
    """x: (B, C, H, W).  w2d, b2d: from prepare_patch_embed_params.

    Returns (B, n_patches, E) in x.dtype (f32 accumulation + f32 bias regardless of
    the streaming dtype of w2d / the patch tiles).
    """
    B, C, H, W = x.shape
    P = patch_size
    if H % P != 0 or W % P != 0:
        raise ValueError(f"spatial dims {(H, W)} must be divisible by patch_size={P}")
    nh, nw = H // P, W // P
    n_patches = nh * nw
    K, E = w2d.shape
    if K != C * P * P:
        raise ValueError(f"weight K={K} does not match C*P*P={C * P * P}")
    out_dtype = x.dtype

    # ---- layout glue (one fused XLA HBM pass under jit): patchify + cast (+ pad) ----
    # TODO(synk): the review asks to fuse this patch extraction into the kernel; doing
    # that needs an in-kernel (C,P,nw,P)->(nw,C*P*P) sublane<->lane relayout (or a
    # per-(c,p) K=P matmul decomposition that wastes ~16x MXU work), neither of which
    # could be validated to lower cleanly here, so the gather stays in fused XLA.
    xp = x.reshape(B, C, nh, P, nw, P)
    xp = jnp.transpose(xp, (0, 2, 4, 1, 3, 5)).reshape(B * n_patches, K)
    xp = xp.astype(w2d.dtype)            # bf16 streaming when requested (v6e / v7x)

    M = B * n_patches
    in_bytes = jnp.dtype(w2d.dtype).itemsize
    out_bytes = jnp.dtype(out_dtype).itemsize
    tn = _choose_tile_n(E, K, in_bytes, _VMEM_TILE_BUDGET)
    tm = _choose_tile_m(M, K, tn, in_bytes, out_bytes, _VMEM_TILE_BUDGET)
    m_pad = pl.cdiv(M, tm) * tm
    if m_pad != M:
        xp = jnp.pad(xp, ((0, m_pad - M), (0, 0)))   # garbage rows, sliced off below

    cost = pl.CostEstimate(
        flops=2 * m_pad * K * E,
        transcendentals=0,
        bytes_accessed=(m_pad * K * in_bytes + K * E * in_bytes + E * 4
                        + m_pad * E * out_bytes),
    )

    out = pl.pallas_call(
        _patch_embed_kernel,
        out_shape=jax.ShapeDtypeStruct((m_pad, E), out_dtype),
        grid=(m_pad // tm, E // tn),
        in_specs=[
            pl.BlockSpec((tm, K), lambda i, j: (i, 0)),
            pl.BlockSpec((K, tn), lambda i, j: (0, j)),
            pl.BlockSpec((1, tn), lambda i, j: (0, j)),
        ],
        out_specs=pl.BlockSpec((tm, tn), lambda i, j: (i, j)),
        compiler_params=pltpu.CompilerParams(
            dimension_semantics=("parallel", "parallel"),
            vmem_limit_bytes=_VMEM_LIMIT_BYTES,
        ),
        cost_estimate=cost,
    )(xp, w2d, b2d)

    if m_pad != M:
        out = out[:M]
    return out.reshape(B, n_patches, E)


def _reference(x, weight, bias, patch_size):
    """Plain-JAX reference identical to PyTorch's PatchEmbed.forward (f32)."""
    y = lax.conv_general_dilated(
        x, weight,
        window_strides=(patch_size, patch_size),
        padding="VALID",
        dimension_numbers=("NCHW", "OIHW", "NCHW"),
    ) + bias.reshape(1, -1, 1, 1)
    B, E, hh, ww = y.shape
    return jnp.transpose(y.reshape(B, E, hh * ww), (0, 2, 1))


if __name__ == "__main__":
    # PatchEmbed(img_size=16, patch_size=4, in_chans=3, embed_dim=128) at small scale.
    img_size, patch_size, in_chans, embed_dim = 16, 4, 3, 128
    B = 2

    key = jax.random.PRNGKey(0)
    kx, kw, kb = jax.random.split(key, 3)

    x = jax.random.normal(kx, (B, in_chans, img_size, img_size), dtype=jnp.float32)
    fan_in = in_chans * patch_size * patch_size
    weight = jax.random.normal(kw, (embed_dim, in_chans, patch_size, patch_size),
                               dtype=jnp.float32) * (1.0 / fan_in) ** 0.5
    bias = jax.random.normal(kb, (embed_dim,), dtype=jnp.float32) * 0.01

    ref = _reference(x, weight, bias, patch_size)
    n_patches = (img_size // patch_size) ** 2

    # f32 path: exact module semantics.
    w2d, b2d = prepare_patch_embed_params(weight, bias)
    out = jax.block_until_ready(patch_embed_forward(x, w2d, b2d, patch_size))
    assert out.shape == (B, n_patches, embed_dim), out.shape
    assert jnp.allclose(out, ref, atol=1e-4, rtol=1e-4), "f32 mismatch vs reference conv"

    # bf16-streaming path (v6e/v7x bandwidth option): bf16 operands, f32 acc + f32 bias.
    w2d_bf, b2d_bf = prepare_patch_embed_params(weight, bias, compute_dtype=jnp.bfloat16)
    out_bf = jax.block_until_ready(patch_embed_forward(x, w2d_bf, b2d_bf, patch_size))
    assert out_bf.shape == (B, n_patches, embed_dim), out_bf.shape
    assert jnp.allclose(out_bf, ref, atol=5e-2, rtol=5e-2), "bf16 mismatch vs reference conv"

    print("KERNEL_OK")
</pallas_src>

<mosaic_0001>
module attributes {stable_mosaic.version = 11 : i64} {
  func.func @_patch_embed_kernel(%arg0: i32, %arg1: i32, %arg2: memref<16x48xf32, #tpu.memory_space<vmem>>, %arg3: memref<48x128xf32, #tpu.memory_space<vmem>>, %arg4: memref<1x128xf32, #tpu.memory_space<vmem>>, %arg5: memref<16x128xf32, #tpu.memory_space<vmem>>) attributes {dimension_semantics = [#tpu.dimension_semantics<parallel>, #tpu.dimension_semantics<parallel>], iteration_bounds = array<i64: 2, 1>, scalar_prefetch = 0 : i64, scratch_operands = 0 : i64, tpu.core_type = #tpu.core_type<tc>, window_params = [{transform_indices = @transform_0, window_bounds = array<i64: 16, 48>}, {transform_indices = @transform_1, window_bounds = array<i64: 48, 128>}, {transform_indices = @transform_2, window_bounds = array<i64: 1, 128>}, {transform_indices = @transform_3, window_bounds = array<i64: 16, 128>}]} {
    %c0 = arith.constant 0 : index
    %c0_0 = arith.constant 0 : index
    %0 = vector.load %arg2[%c0, %c0_0] : memref<16x48xf32, #tpu.memory_space<vmem>>, vector<16x48xf32>
    %c0_1 = arith.constant 0 : index
    %c0_2 = arith.constant 0 : index
    %1 = vector.load %arg3[%c0_1, %c0_2] : memref<48x128xf32, #tpu.memory_space<vmem>>, vector<48x128xf32>
    %cst = arith.constant dense<0.000000e+00> : vector<16x128xf32>
    %2 = tpu.matmul %0, %1, %cst {dimension_numbers = #tpu.dot_dimension_numbers<[1], [0], [0], [1], [0, 0, 1, 1], [], []>} : vector<16x48xf32>, vector<48x128xf32>, vector<16x128xf32> -> vector<16x128xf32>
    %c0_3 = arith.constant 0 : index
    %c0_4 = arith.constant 0 : index
    %3 = vector.load %arg4[%c0_3, %c0_4] : memref<1x128xf32, #tpu.memory_space<vmem>>, vector<1x128xf32>
    %4 = vector.broadcast %3 : vector<1x128xf32> to vector<16x128xf32>
    %5 = arith.addf %2, %4 : vector<16x128xf32>
    %c0_5 = arith.constant 0 : index
    %c0_6 = arith.constant 0 : index
    %6 = vector.load %arg5[%c0_5, %c0_6] : memref<16x128xf32, #tpu.memory_space<vmem>>, vector<16x128xf32>
    tpu.vector_store %arg5[%c0_5, %c0_6], %5 {strides = array<i32>} : memref<16x128xf32, #tpu.memory_space<vmem>>, vector<16x128xf32>,
    return
  }
  func.func @transform_0(%arg0: i32, %arg1: i32) -> (i32, i32) {
    %c0_i32 = arith.constant 0 : i32
    %c0_i32_0 = arith.constant 0 : i32
    return %arg0, %c0_i32 : i32, i32
  }
  func.func @transform_1(%arg0: i32, %arg1: i32) -> (i32, i32) {
    %c0_i32 = arith.constant 0 : i32
    %c0_i32_0 = arith.constant 0 : i32
    return %c0_i32, %arg1 : i32, i32
  }
  func.func @transform_2(%arg0: i32, %arg1: i32) -> (i32, i32) {
    %c0_i32 = arith.constant 0 : i32
    %c0_i32_0 = arith.constant 0 : i32
    return %c0_i32, %arg1 : i32, i32
  }
  func.func @transform_3(%arg0: i32, %arg1: i32) -> (i32, i32) {
    %c0_i32 = arith.constant 0 : i32
    return %arg0, %arg1 : i32, i32
  }
}

</mosaic_0001>

<llo_original>
// kernel: patch_embed_forward.1
$region0: #{patch_embed_forward.1}
  #allocation0 [shape = 'u32[]', space=smem, size = 0x4, offset = 0x4, fixed_abs, tag = 'smem constant byte address 0x4 - core index']
  #allocation1 [shape = 'u32[144,128]{1,0:T(1,128)}', space=vmem, size = 0x12000, scoped, tag = 'internal scratch']
  %s0 = inlined_call_operand.vmem [shape: f32[32,48], index: 0, kind: input, shape index: {}]
  %s1 = inlined_call_operand.vmem [shape: f32[48,128], index: 1, kind: input, shape index: {}]
  %s2 = inlined_call_operand.vmem [shape: f32[1,128], index: 2, kind: input, shape index: {}]
  %s3 = inlined_call_operand.hbm [shape: f32[32,128], index: 3, kind: output, shape index: {}]
  %s4 = sld [smem:[#allocation0]]
  $region45: #{patch_embed_forward.1} parent=0
    _
  %s6 = ssub.s32 1, %s4
  %s7 = scalar_select 0, %s6, %s4
  $region1: #{patch_embed_forward.1} parent=0
    #allocation2 [shape = 'u8[16384]{0}', space=vmem, size = 0x4000, scoped, tag = 'output window, operand 0']
    #allocation3 [shape = 's32[2]{0}', space=sflag, size = 0x8, scoped, tag = 'scoped memory for patch_embed_forward.1']
    %8 = vsyncpa [#allocation3], 0
    %s9 = scalar_lea.sflag [#allocation3], 1
    %10 = vsyncpa %s9, 0
    loop: start=0, step=1, limit=4
    $region2: #{patch_embed_forward.1} parent=1 // loop_pre_header
      _
    $region3: #{patch_embed_forward.1} parent=1 // loop_header
      %s12 = sphi 0, %s16
      %p13 = scmp.ge.s32.totalorder %s12, 4
      %s19 = sphi 0, %s31
      %s20 = sphi 0, %s27
      %s21 = sphi 0, %s19
      %s22 = sphi 0, %s20
      %s23 = sphi 0, %s21
      %s24 = sphi 0, %s22
      %s34 = sphi 0, %s36
      %s37 = sphi 0, %s34
      %s38 = sphi 0, %s37
      %s54 = sphi 0, %s38
      %s60 = sphi 0, %s62
      %s63 = sphi 0, %s60
      %s64 = sphi 0, %s63
      %s80 = sphi 0, %s64
      %s86 = sphi 0, %s88
      %s89 = sphi 0, %s86
      %s90 = sphi 0, %s89
      %s106 = sphi 0, %s90
      %s114 = sphi 0, %s116
      %s117 = sphi 0, %s114
      %s118 = sphi 0, %s117
      %s134 = sphi 0, %s118
    $region4: #{patch_embed_forward.1} parent=1 // loop_header_branch
      %15 = sbr.rel (%p13) target = $region8
    $region5: #{patch_embed_forward.1} parent=1 // loop_body
      %s17 = ssub.s32 %s12, 1
      %s18 = ssub.s32 %s12, 2
      %s25 = sadd.s32 1, %s20
      %p26 = scmp.ge.s32.totalorder %s25, 1
      %s27 = scalar_select %p26, 0, %s25
      %s28 = sadd.s32 1, %s19
      %s29 = scalar_select %p26, %s28, %s19
      %p30 = scmp.ge.s32.totalorder %s29, 2
      %s31 = scalar_select %p30, 0, %s29
      %s32 = ssub.s32 %s19, %s31
      %p33 = scmp.eq.s32.totalorder %s32, 0
      %s35 = sadd.s32 %s34, 1
      %s36 = scalar_select %p33, %s34, %s35
      %p39 = pneg %p33
      %p40 = scmp.eq.s32.totalorder %s12, 1
      %p41 = por %p39, %p40
      %p42 = scmp.ne.s32.totalorder %s34, %s37
      %p43 = scmp.eq.s32.totalorder %s12, 0
      %p44 = por %p42, %p43
      %p45 = scmp.ne.s32.totalorder %s34, %s37
      %p46 = scmp.eq.s32.totalorder %s17, 1
      %p47 = por %p45, %p46
      %p48 = scmp.ne.s32.totalorder %s37, %s38
      %p49 = scmp.eq.s32.totalorder %s17, 0
      %p50 = por %p48, %p49
      %p51 = scmp.ne.s32.totalorder %s37, %s38
      %p52 = scmp.eq.s32.totalorder %s18, 1
      %p53 = por %p51, %p52
      %p55 = scmp.ne.s32.totalorder %s38, %s54
      %p56 = scmp.eq.s32.totalorder %s18, 0
      %p57 = por %p55, %p56
      %s58 = ssub.s32 %s20, %s27
      %p59 = scmp.eq.s32.totalorder %s58, 0
      %s61 = sadd.s32 %s60, 1
      %s62 = scalar_select %p59, %s60, %s61
      %p65 = pneg %p59
      %p66 = scmp.eq.s32.totalorder %s12, 1
      %p67 = por %p65, %p66
      %p68 = scmp.ne.s32.totalorder %s60, %s63
      %p69 = scmp.eq.s32.totalorder %s12, 0
      %p70 = por %p68, %p69
      %p71 = scmp.ne.s32.totalorder %s60, %s63
      %p72 = scmp.eq.s32.totalorder %s17, 1
      %p73 = por %p71, %p72
      %p74 = scmp.ne.s32.totalorder %s63, %s64
      %p75 = scmp.eq.s32.totalorder %s17, 0
      %p76 = por %p74, %p75
      %p77 = scmp.ne.s32.totalorder %s63, %s64
      %p78 = scmp.eq.s32.totalorder %s18, 1
      %p79 = por %p77, %p78
      %p81 = scmp.ne.s32.totalorder %s64, %s80
      %p82 = scmp.eq.s32.totalorder %s18, 0
      %p83 = por %p81, %p82
      %s84 = ssub.s32 %s20, %s27
      %p85 = scmp.eq.s32.totalorder %s84, 0
      %s87 = sadd.s32 %s86, 1
      %s88 = scalar_select %p85, %s86, %s87
      %p91 = pneg %p85
      %p92 = scmp.eq.s32.totalorder %s12, 1
      %p93 = por %p91, %p92
      %p94 = scmp.ne.s32.totalorder %s86, %s89
      %p95 = scmp.eq.s32.totalorder %s12, 0
      %p96 = por %p94, %p95
      %p97 = scmp.ne.s32.totalorder %s86, %s89
      %p98 = scmp.eq.s32.totalorder %s17, 1
      %p99 = por %p97, %p98
      %p100 = scmp.ne.s32.totalorder %s89, %s90
      %p101 = scmp.eq.s32.totalorder %s17, 0
      %p102 = por %p100, %p101
      %p103 = scmp.ne.s32.totalorder %s89, %s90
      %p104 = scmp.eq.s32.totalorder %s18, 1
      %p105 = por %p103, %p104
      %p107 = scmp.ne.s32.totalorder %s90, %s106
      %p108 = scmp.eq.s32.totalorder %s18, 0
      %p109 = por %p107, %p108
      %s110 = ssub.s32 %s19, %s31
      %s111 = ssub.s32 %s20, %s27
      %s112 = sor.u32 %s110, %s111
      %p113 = scmp.eq.s32.totalorder %s112, 0
      %s115 = sadd.s32 %s114, 1
      %s116 = scalar_select %p113, %s114, %s115
      %p119 = pneg %p113
      %p120 = scmp.eq.s32.totalorder %s12, 1
      %p121 = por %p119, %p120
      %p122 = scmp.ne.s32.totalorder %s114, %s117
      %p123 = scmp.eq.s32.totalorder %s12, 0
      %p124 = por %p122, %p123
      %p125 = scmp.ne.s32.totalorder %s114, %s117
      %p126 = scmp.eq.s32.totalorder %s17, 1
      %p127 = por %p125, %p126
      %p128 = scmp.ne.s32.totalorder %s117, %s118
      %p129 = scmp.eq.s32.totalorder %s17, 0
      %p130 = por %p128, %p129
      %p131 = scmp.ne.s32.totalorder %s117, %s118
      %p132 = scmp.eq.s32.totalorder %s18, 1
      %p133 = por %p131, %p132
      %p135 = scmp.ne.s32.totalorder %s118, %s134
      %p136 = scmp.eq.s32.totalorder %s18, 0
      %p137 = por %p135, %p136
      %p138 = scmp.le.s32.totalorder 1, %s12
      %p139 = scmp.lt.s32.totalorder %s12, 3
      %p140 = pnand %p138, %p139
      %p141 = pneg %p140
      // Predicated region
      $region9: #{patch_embed_forward.1} parent=5 // pred_check
        _
      $region10: #{patch_embed_forward.1} parent=5 // pred_check_branch
        %143 = sbr.rel (%p140) target = $region12
      $region11: #{patch_embed_forward.1} parent=5 // pred_region
        %s144 = ssub.s32 %s12, 1
        // Predicated region
        $region13: #{patch_embed_forward.1} parent=11 // pred_check
          %p145 = pneg %p76
        $region14: #{patch_embed_forward.1} parent=11 // pred_check_branch
          %147 = sbr.rel (%p145) target = $region16
        $region15: #{patch_embed_forward.1} parent=11 // pred_region
          %p148 = scmp.lt.s32.totalorder %s22, 0
          %s149 = scalar_select %p148, %s22, 0
          %s150 = smul.addr %s149, 8
          %s151 = scalar_lea.vmem %s1, %s150
        $region16: #{patch_embed_forward.1} parent=11 // pred_fallthru
          _
        // Predicated region
        $region17: #{patch_embed_forward.1} parent=11 // pred_check
          %p152 = pneg %p102
        $region18: #{patch_embed_forward.1} parent=11 // pred_check_branch
          %154 = sbr.rel (%p152) target = $region20
        $region19: #{patch_embed_forward.1} parent=11 // pred_region
          %p155 = scmp.lt.s32.totalorder %s22, 0
          %s156 = scalar_select %p155, %s22, 0
          %s157 = scalar_lea.vmem %s2, %s156
        $region20: #{patch_embed_forward.1} parent=11 // pred_fallthru
          _
      $region12: #{patch_embed_forward.1} parent=5 // pred_fallthru
        _
      %p158 = scmp.lt.s32.totalorder %s12, 2
      // Predicated region
      $region21: #{patch_embed_forward.1} parent=5 // pred_check
        %p159 = pneg %p158
      $region22: #{patch_embed_forward.1} parent=5 // pred_check_branch
        %161 = sbr.rel (%p159) target = $region24
      $region23: #{patch_embed_forward.1} parent=5 // pred_region
        // Predicated region
        $region25: #{patch_embed_forward.1} parent=23 // pred_check
          %p162 = pneg %p44
        $region26: #{patch_embed_forward.1} parent=23 // pred_check_branch
          %164 = sbr.rel (%p162) target = $region28
        $region27: #{patch_embed_forward.1} parent=23 // pred_region
          %s165 = smul.u32 2, %s19
          %p166 = scmp.lt.s32.totalorder %s165, 3
          %s167 = scalar_select %p166, %s165, 3
          %s168 = smul.addr %s167, 8
          %s169 = scalar_lea.vmem %s0, %s168
          %s170 = smul.u32 2, %s19
        $region28: #{patch_embed_forward.1} parent=23 // pred_fallthru
          _
      $region24: #{patch_embed_forward.1} parent=5 // pred_fallthru
        _
      %p171 = scmp.le.s32.totalorder 1, %s12
      %p172 = scmp.lt.s32.totalorder %s12, 3
      %p173 = pnand %p171, %p172
      %p174 = pneg %p173
      // Predicated region
      $region29: #{patch_embed_forward.1} parent=5 // pred_check
        _
      $region30: #{patch_embed_forward.1} parent=5 // pred_check_branch
        %176 = sbr.rel (%p173) target = $region32
      $region31: #{patch_embed_forward.1} parent=5 // pred_region
        %s177 = ssub.s32 %s12, 1
        %s178 = smul.u32 2, %s21
        %p179 = scmp.lt.s32.totalorder %s178, 3
        %s180 = scalar_select %p179, %s178, 3
        %s181 = smul.addr %s180, 8
        %s182 = scalar_lea.vmem %s0, %s181
        %p183 = pneg %p50
        %p184 = pneg %p47
        %p185 = scmp.lt.s32.totalorder %s22, 0
        %s186 = scalar_select %p185, %s22, 0
        %s187 = smul.addr %s186, 8
        %s188 = scalar_lea.vmem %s1, %s187
        %p189 = pneg %p76
        %p190 = pneg %p73
        %p191 = scmp.lt.s32.totalorder %s22, 0
        %s192 = scalar_select %p191, %s22, 0
        %s193 = scalar_lea.vmem %s2, %s192
        %p194 = pneg %p102
        %p195 = pneg %p99
        %p196 = pneg %p130
        %p197 = pneg %p127
        %s198 = sand.u32 %s117, 1
        %s199 = scalar_lea.sflag [#allocation3], %s198
        %s200 = sand.u32 %s117, 1
        %s201 = smul.addr %s200, 16
        %s202 = scalar_lea.vmem [#allocation2], %s201
        %s203 = smul.u32 2, %s21
        %p204 = scmp.lt.s32.totalorder %s203, 3
        %s205 = scalar_select %p204, %s203, 3
        %s206 = smul.addr %s205, 8
        %s207 = scalar_lea.vmem %s0, %s206
        %s208 = smul.u32 2, %s21
        %p209 = scmp.lt.s32.totalorder %s22, 0
        %s210 = scalar_select %p209, %s22, 0
        %s211 = smul.addr %s210, 8
        %s212 = scalar_lea.vmem %s1, %s211
        %p213 = scmp.lt.s32.totalorder %s22, 0
        %s214 = scalar_select %p213, %s22, 0
        %s215 = scalar_lea.vmem %s2, %s214
        %s216 = smul.u32 2, %s21
        %v217 = vld [vmem:[%s207] sm:$0xff]
        %v218 = vld [vmem:[%s207 + $0x8] sm:$0xff]
        %v219 = vld [vmem:[%s212] sm:$0xff]
        %v220 = vld [vmem:[%s212 + $0x8] sm:$0xff]
        %v221 = vld [vmem:[%s212 + $0x10] sm:$0xff]
        %v222 = vld [vmem:[%s212 + $0x18] sm:$0xff]
        %v223 = vld [vmem:[%s212 + $0x20] sm:$0xff]
        %v224 = vld [vmem:[%s212 + $0x28] sm:$0xff]
        %v225 = vld [vmem:[%s215] sm:$0x1]
        %v227 = vlaneseq
        %v228 = vshrl.u32 %v227, 7
        %v229 = vsub.s32 0, %v228
        %v230 = vrot.slane %v225, %v229
        %vm232 = vcmask 392192
        %v234 = vsel %vm232, %v217, 0
        %v237 = vsel %vm232, %v218, 0
        %239 = vmatprep.subr.mxu0 0.0
        %240 = vmatpush1.msra.mxu0 0.0
        %241 = vmatprep.subr.mxu0 0.0
        %242 = vmatpush1.msra.mxu0 0.0
        %243 = vmatprep.subr.mxu0 0.0
        %244 = vmatpush1.msra.mxu0 0.0
        %245 = vmatprep.subr.mxu0 0.0
        %246 = vmatpush1.msra.mxu0 0.0
        %247 = vmatprep.subr.mxu0 0.0
        %248 = vmatpush1.msra.mxu0 0.0
        %249 = vmatprep.subr.mxu0 0.0
        %250 = vmatpush1.msra.mxu0 0.0
        %251 = vmatprep.subr.mxu0 0.0
        %252 = vmatpush1.msra.mxu0 0.0
        %253 = vmatprep.subr.mxu0 0.0
        %254 = vmatpush1.msra.mxu0 0.0
        %255 = vmatprep.subr.mxu0 0.0
        %256 = vmatpush1.msra.mxu0 0.0
        %257 = vmatprep.subr.mxu0 0.0
        %258 = vmatpush1.msra.mxu0 0.0
        %259 = vmatprep.subr.mxu0 0.0
        %260 = vmatpush1.msra.mxu0 %v224
        %261 = vmatprep.subr.mxu0 0.0
        %262 = vmatpush1.msra.mxu0 %v223
        %263 = vmatprep.subr.mxu0 0.0
        %264 = vmatpush1.msra.mxu0 %v222
        %265 = vmatprep.subr.mxu0 0.0
        %266 = vmatpush1.msra.mxu0 %v221
        %267 = vmatprep.subr.mxu0 0.0
        %268 = vmatpush1.msra.mxu0 %v220
        %269 = vmatprep.subr.mxu0 0.0
        %270 = vmatpush1.msra.mxu0 %v219
        %271 = vmatprep.subr.mxu0 0.0
        %272 = vmatpush2.msra.mxu0 0.0
        %273 = vmatprep.subr.mxu0 0.0
        %274 = vmatpush2.msra.mxu0 0.0
        %275 = vmatprep.subr.mxu0 0.0
        %276 = vmatpush2.msra.mxu0 0.0
        %277 = vmatprep.subr.mxu0 0.0
        %278 = vmatpush2.msra.mxu0 0.0
        %279 = vmatprep.subr.mxu0 0.0
        %280 = vmatpush2.msra.mxu0 0.0
        %281 = vmatprep.subr.mxu0 0.0
        %282 = vmatpush2.msra.mxu0 0.0
        %283 = vmatprep.subr.mxu0 0.0
        %284 = vmatpush2.msra.mxu0 0.0
        %285 = vmatprep.subr.mxu0 0.0
        %286 = vmatpush2.msra.mxu0 0.0
        %287 = vmatprep.subr.mxu0 0.0
        %288 = vmatpush2.msra.mxu0 0.0
        %289 = vmatprep.subr.mxu0 0.0
        %290 = vmatpush2.msra.mxu0 0.0
        %291 = vmatprep.subr.mxu0 0.0
        %292 = vmatpush2.msra.mxu0 0.0
        %293 = vmatprep.subr.mxu0 0.0
        %294 = vmatpush2.msra.mxu0 0.0
        %295 = vmatprep.subr.mxu0 0.0
        %296 = vmatpush2.msra.mxu0 0.0
        %297 = vmatprep.subr.mxu0 0.0
        %298 = vmatpush2.msra.mxu0 0.0
        %299 = vmatprep.subr.mxu0 0.0
        %300 = vmatpush2.msra.mxu0 0.0
        %301 = vmatprep.subr.mxu0 0.0
        %302 = vmatpush2.msra.mxu0 0.0
        %303 = vmatprep.mubr.f32.mxu0 0.0
        %304 = vmatmul.mubr.f32.gmra.mxu0 %v234
        %v305 = vpop.f32.mrf.mxu0
        %v306 = vadd.f32 %v230, %v305
        %v307 = vpop.f32.mrf.mxu0
        %308 = vmatprep.mubr.f32.mxu0 0.0
        %309 = vmatmul.mubr.f32.gmra.mxu0 %v237
        %v310 = vpop.f32.mrf.mxu0
        %v311 = vadd.f32 %v230, %v310
        %v312 = vpop.f32.mrf.mxu0
        %313 = vdwg.mxu0
        %314 = vst [vmem:[%s202] sm:$0xff] %v306
        %315 = vst [vmem:[%s202 + $0x8] sm:$0xff] %v311
        %s316 = sand.u32 %s117, 1
        %s317 = scalar_lea.sflag [#allocation3], %s316
        %s318 = sand.u32 %s117, 1
        %s319 = smul.addr %s318, 16
        %s320 = scalar_lea.vmem [#allocation2], %s319
        // Predicated region
        $region33: #{patch_embed_forward.1} parent=31 // pred_check
          %p321 = pneg %p127
        $region34: #{patch_embed_forward.1} parent=31 // pred_check_branch
          %323 = sbr.rel (%p321) target = $region36
        $region35: #{patch_embed_forward.1} parent=31 // pred_region
          %s324 = smul.u32 2, %s21
          %s326 = ssub.s32 256, 256
          %327 = vsyncadd %s317, %s326
          %s328 = sadd.s32 %s22, %s324
          %s329 = smul.addr %s328, 128
          %s330 = scalar_lea.hbm %s3, %s329
          %s331 = sshll.u32 %s320, 4
          %s332 = int_to_ptr.vmem [resolvable:$true] %s331
          %337 = dma.vmem_to_hbm [thread:$0]  %s332, 256, %s330, %s317, 128, 128, 8
        $region36: #{patch_embed_forward.1} parent=31 // pred_fallthru
          _
      $region32: #{patch_embed_forward.1} parent=5 // pred_fallthru
        _
      %p338 = scmp.le.s32.totalorder 2, %s12
      // Predicated region
      $region37: #{patch_embed_forward.1} parent=5 // pred_check
        %p339 = pneg %p338
      $region38: #{patch_embed_forward.1} parent=5 // pred_check_branch
        %341 = sbr.rel (%p339) target = $region40
      $region39: #{patch_embed_forward.1} parent=5 // pred_region
        %s342 = ssub.s32 %s12, 2
        // Predicated region
        $region41: #{patch_embed_forward.1} parent=39 // pred_check
          %p343 = pneg %p133
        $region42: #{patch_embed_forward.1} parent=39 // pred_check_branch
          %345 = sbr.rel (%p343) target = $region44
        $region43: #{patch_embed_forward.1} parent=39 // pred_region
          %s346 = sand.u32 %s118, 1
          %s347 = scalar_lea.sflag [#allocation3], %s346
          %s348 = sand.u32 %s118, 1
          %s349 = smul.addr %s348, 16
          %s350 = scalar_lea.vmem [#allocation2], %s349
          %351 = dma.done %s347, 256
        $region44: #{patch_embed_forward.1} parent=39 // pred_fallthru
          _
      $region40: #{patch_embed_forward.1} parent=5 // pred_fallthru
        _
    $region6: #{patch_embed_forward.1} parent=1 // loop_footer
      %s16 = sadd.s32 1, %s12
    $region7: #{patch_embed_forward.1} parent=1 // loop_footer_branch
      %11 = sbr.rel target = $region3
    $region8: #{patch_embed_forward.1} parent=1 // loop_exit
      _
    %352 = vsyncpa [#allocation3], 1
    %s353 = scalar_lea.sflag [#allocation3], 1
    %354 = vsyncpa %s353, 1

</llo_original>
